<compile_context>
chip_gen: v7x
topology: tpu7x:2x2x1
jax: 0.10.0
libtpu: 0.0.40
codegen_flags: <defaults>
</compile_context>

<pallas_src>
import math

import jax
import jax.numpy as jnp
import numpy as np
from jax import lax
from jax.experimental import pallas as pl
from jax.experimental.pallas import tpu as pltpu

# ----------------------------- model config --------------------------------
FEATURE_DIMS = {"numeric": 8, "categorical": 16, "text": 12}   # S = 3 "tokens"
HIDDEN_DIM = 32
NUM_HEADS = 4
OUTPUT_DIM = 1
BATCH = 2

assert HIDDEN_DIM % NUM_HEADS == 0


# --------------------------- fused forward kernel ---------------------------
def _make_fused_kernel(S, TB):
    """Kernel over one batch tile (TB rows, batch stacked along sublanes per
    sequence position). Ref order:
      [x_stk, Wfb, Wqkv, bqkv, P, Wa, ba, W2t, b2t, out]."""

    def kernel(x_ref, wfb_ref, wqkv_ref, bqkv_ref, p_ref, wa_ref, ba_ref,
               w2t_ref, b2t_ref, o_ref):
        H = wqkv_ref.shape[0]

        # 1) all S feature MLPs in ONE matmul. Per-feature biases are folded
        #    into Wfb through the indicator columns of x_stk, so this is exact.
        x_all = jnp.concatenate([x_ref[s] for s in range(S)], axis=0)   # (S*TB, Din)
        emb = jnp.maximum(
            jnp.dot(x_all, wfb_ref[...], preferred_element_type=jnp.float32),
            0.0)                                                        # (S*TB, H)
        # Dropout == identity at eval.

        # 2) fused Q/K/V projection (1/sqrt(head_dim) folded into the Q
        #    columns); single bias add on the fused result.
        qkv = (jnp.dot(emb, wqkv_ref[...], preferred_element_type=jnp.float32)
               + bqkv_ref[...])                                         # (S*TB, 3H)
        qs = [qkv[s * TB:(s + 1) * TB, 0:H] for s in range(S)]
        ks = [qkv[s * TB:(s + 1) * TB, H:2 * H] for s in range(S)]
        vs = [qkv[s * TB:(s + 1) * TB, 2 * H:3 * H] for s in range(S)]

        # 3) all S*S per-head score reductions in ONE matmul: stack the
        #    elementwise q_i*k_j products along sublanes and multiply by the
        #    block-diagonal head-pooling matrix P — per-head dot product,
        #    replicated across that head's lanes.
        prod = jnp.concatenate([qs[i] * ks[j]
                                for i in range(S) for j in range(S)], axis=0)
        sc_all = jnp.dot(prod, p_ref[...],
                         preferred_element_type=jnp.float32)            # (S*S*TB, H)

        def score(i, j):
            r = (i * S + j) * TB
            return sc_all[r:r + TB, :]

        # 4) softmax over key positions + weighted V sum: pure lane-wise
        #    VPU math, reciprocal on the (otherwise idle) EUP slot.
        o_sum = None
        for i in range(S):
            row = [score(i, j) for j in range(S)]
            m = row[0]
            for j in range(1, S):
                m = jnp.maximum(m, row[j])
            ps = [jnp.exp(row[j] - m) for j in range(S)]
            denom = ps[0]
            for j in range(1, S):
                denom = denom + ps[j]
            inv = pl.reciprocal(denom, approx=True)                     # EUP slot
            o_i = (ps[0] * inv) * vs[0]
            for j in range(1, S):
                o_i = o_i + (ps[j] * inv) * vs[j]
            o_sum = o_i if o_sum is None else o_sum + o_i               # (TB, H)

        # 5) attention out-projection + mean pool + first FC folded into ONE
        #    matmul at param-prep time (Wa = Wout @ W1 / S, ba = bout@W1 + b1).
        h1 = jnp.maximum(
            jnp.dot(o_sum, wa_ref[...], preferred_element_type=jnp.float32)
            + ba_ref[...], 0.0)                                         # (TB, 2H)

        # 6) final FC computed transposed so the store is lane-dense:
        #    (O, 2H) x (TB, 2H)^T -> (O, TB), batch along the lane axis.
        out = lax.dot_general(w2t_ref[...], h1,
                              dimension_numbers=(((1,), (1,)), ((), ())),
                              preferred_element_type=jnp.float32)
        o_ref[...] = out + b2t_ref[...]

    return kernel


# ------------------------------- wrapper -------------------------------------
def _round_up(x, m):
    return ((x + m - 1) // m) * m


def _build_stacked_input(feature_dict, names, dims, b_pad):
    """(S, B_pad, Dsum+S): feature s's data sits in its column slot, a 1.0 in
    its indicator column (selects the bias row of Wfb), zeros elsewhere
    (including the batch padding rows, which therefore stay finite)."""
    S = len(names)
    B = feature_dict[names[0]].shape[0]
    d_sum = sum(dims)
    parts = []
    off = 0
    for s, (name, d) in enumerate(zip(names, dims)):
        x = feature_dict[name].astype(jnp.float32)
        row = jnp.zeros((b_pad, d_sum + S), jnp.float32)
        row = row.at[:B, off:off + d].set(x)
        row = row.at[:B, d_sum + s].set(1.0)
        parts.append(row)
        off += d
    return jnp.stack(parts, axis=0)                                     # (S,Bp,Din)


def hybrid_transformer_forward(feature_dict, kparams, *, batch_tile=512):
    names = kparams["names"]
    dims = kparams["dims"]
    S = len(names)
    B = feature_dict[names[0]].shape[0]
    O = kparams["W2t"].shape[0]

    # Tile policy: one (8-aligned) tile for small B; batch_tile-sized tiles
    # (multiple of 128 -> lane-dense output blocks + (8,128) alignment) when
    # B is large.  v7x: pass batch_tile ~= round_up(B/2, 128) so each of the
    # two TensorCores gets a grid step; v5e/v6e: largest comfortable tile.
    if B <= batch_tile:
        TB = _round_up(B, 8)
    else:
        assert batch_tile % 128 == 0, "batch_tile must be a multiple of 128"
        TB = batch_tile
    num_tiles = pl.cdiv(B, TB)
    b_pad = num_tiles * TB

    x_stk = _build_stacked_input(feature_dict, names, dims, b_pad)
    d_in = x_stk.shape[-1]

    weights = [kparams[k] for k in
               ("Wfb", "Wqkv", "bqkv", "P", "Wa", "ba", "W2t", "b2t")]

    in_specs = [pl.BlockSpec((S, TB, d_in), lambda i: (0, i, 0))]
    in_specs += [pl.BlockSpec(w.shape, lambda i: (0, 0)) for w in weights]

    out_t = pl.pallas_call(
        _make_fused_kernel(S, TB),
        out_shape=jax.ShapeDtypeStruct((O, b_pad), jnp.float32),
        grid=(num_tiles,),
        in_specs=in_specs,
        out_specs=pl.BlockSpec((O, TB), lambda i: (0, i)),
        compiler_params=pltpu.CompilerParams(
            dimension_semantics=("parallel",)),      # batch tiles across v7x TCs
    )(x_stk, *weights)

    return out_t[:, :B].T                            # (B, O)


# -------------------- one-time kernel-param preparation ----------------------
def prepare_kernel_params(params):
    """Canonical (PyTorch-layout) params -> kernel-ready params (one-time):
       * vertically stack the per-feature weights + bias rows (indicator fold),
       * fuse the in_proj into a single Wqkv with 1/sqrt(head_dim) folded in,
       * build the block-diagonal head-pooling matrix P,
       * fold out-proj + mean-pool + FC1 into Wa/ba, transpose W2/b2."""
    H = HIDDEN_DIM
    hd = H // NUM_HEADS
    scale = 1.0 / math.sqrt(hd)

    names = list(params["Wf"].keys())
    dims = [int(params["Wf"][n].shape[0]) for n in names]
    S = len(names)

    # (Dsum + S, H): stacked feature weights, then one bias row per feature.
    Wfb = jnp.concatenate([params["Wf"][n] for n in names]
                          + [params["bf"][n] for n in names], axis=0)

    win, bin_ = params["Win"], params["bin"]
    Wqkv = jnp.concatenate([win[:, :H] * scale, win[:, H:]], axis=1)    # (H, 3H)
    bqkv = jnp.concatenate([bin_[:, :H] * scale, bin_[:, H:]], axis=1)  # (1, 3H)

    head_id = np.arange(H) // hd
    P = jnp.asarray((head_id[:, None] == head_id[None, :]).astype(np.float32))

    Wa = (params["Wout"] @ params["W1"]) / float(S)                     # (H, 2H)
    ba = params["bout"] @ params["W1"] + params["b1"]                   # (1, 2H)

    return {
        "names": names, "dims": dims,
        "Wfb": Wfb, "Wqkv": Wqkv, "bqkv": bqkv, "P": P,
        "Wa": Wa, "ba": ba,
        "W2t": params["W2"].T, "b2t": params["b2"].T,
    }


# --------------------------- pure-JAX reference ------------------------------
def reference_forward(feature_dict, params):
    embs = [jax.nn.relu(feature_dict[n] @ params["Wf"][n] + params["bf"][n])
            for n in feature_dict]
    x = jnp.stack(embs, axis=0)                       # (S, B, H) PyTorch layout
    S, B, H = x.shape
    nh, hd = NUM_HEADS, H // NUM_HEADS
    qkv = x @ params["Win"] + params["bin"]           # (S, B, 3H)
    q, k, v = qkv[..., :H], qkv[..., H:2 * H], qkv[..., 2 * H:]

    def to_heads(t):                                  # (S,B,H) -> (B,nh,S,hd)
        return t.reshape(S, B, nh, hd).transpose(1, 2, 0, 3)

    qh, kh, vh = map(to_heads, (q, k, v))
    scores = jnp.einsum('bhid,bhjd->bhij', qh, kh) / math.sqrt(hd)
    p = jax.nn.softmax(scores, axis=-1)
    o = jnp.einsum('bhij,bhjd->bhid', p, vh)          # (B,nh,S,hd)
    o = o.transpose(2, 0, 1, 3).reshape(S, B, H)
    attn = o @ params["Wout"] + params["bout"]
    pooled = attn.mean(axis=0)                        # (B, H)
    h1 = jax.nn.relu(pooled @ params["W1"] + params["b1"])
    return h1 @ params["W2"] + params["b2"]


# ------------------------------- param init ----------------------------------
def init_params(key):
    H, O = HIDDEN_DIM, OUTPUT_DIM
    keys = jax.random.split(key, 16)
    ki = iter(keys)
    params = {"Wf": {}, "bf": {}}
    for name, dim in FEATURE_DIMS.items():
        params["Wf"][name] = 0.1 * jax.random.normal(next(ki), (dim, H), jnp.float32)
        params["bf"][name] = 0.05 * jax.random.normal(next(ki), (1, H), jnp.float32)
    params["Win"] = 0.1 * jax.random.normal(next(ki), (H, 3 * H), jnp.float32)
    params["bin"] = 0.05 * jax.random.normal(next(ki), (1, 3 * H), jnp.float32)
    params["Wout"] = 0.1 * jax.random.normal(next(ki), (H, H), jnp.float32)
    params["bout"] = 0.05 * jax.random.normal(next(ki), (1, H), jnp.float32)
    params["W1"] = 0.1 * jax.random.normal(next(ki), (H, 2 * H), jnp.float32)
    params["b1"] = 0.05 * jax.random.normal(next(ki), (1, 2 * H), jnp.float32)
    params["W2"] = 0.1 * jax.random.normal(next(ki), (2 * H, O), jnp.float32)
    params["b2"] = 0.05 * jax.random.normal(next(ki), (1, O), jnp.float32)
    return params


# --------------------------------- main ---------------------------------------
if __name__ == "__main__":
    key = jax.random.PRNGKey(0)
    pkey, *xkeys = jax.random.split(key, 1 + len(FEATURE_DIMS))
    params = init_params(pkey)
    kparams = prepare_kernel_params(params)       # one-time transform

    feature_dict = {
        name: jax.random.normal(xk, (BATCH, dim), jnp.float32)
        for xk, (name, dim) in zip(xkeys, FEATURE_DIMS.items())
    }

    logits = hybrid_transformer_forward(feature_dict, kparams)
    logits = jax.block_until_ready(logits)

    ref = reference_forward(feature_dict, params)
    np.testing.assert_allclose(np.asarray(logits), np.asarray(ref),
                               rtol=2e-3, atol=2e-3)

    assert logits.shape == (BATCH, OUTPUT_DIM)
    print("KERNEL_OK")
</pallas_src>

<mosaic_0001>
module attributes {stable_mosaic.version = 11 : i64} {
  func.func @kernel(%arg0: i32, %arg1: memref<3x8x39xf32, #tpu.memory_space<vmem>>, %arg2: memref<39x32xf32, #tpu.memory_space<vmem>>, %arg3: memref<32x96xf32, #tpu.memory_space<vmem>>, %arg4: memref<1x96xf32, #tpu.memory_space<vmem>>, %arg5: memref<32x32xf32, #tpu.memory_space<vmem>>, %arg6: memref<32x64xf32, #tpu.memory_space<vmem>>, %arg7: memref<1x64xf32, #tpu.memory_space<vmem>>, %arg8: memref<1x64xf32, #tpu.memory_space<vmem>>, %arg9: memref<1x1xf32, #tpu.memory_space<vmem>>, %arg10: memref<1x8xf32, #tpu.memory_space<vmem>>) attributes {dimension_semantics = [#tpu.dimension_semantics<parallel>], iteration_bounds = array<i64: 1>, scalar_prefetch = 0 : i64, scratch_operands = 0 : i64, tpu.core_type = #tpu.core_type<tc>, window_params = [{transform_indices = @transform_0, window_bounds = array<i64: 3, 8, 39>}, {pipeline_mode = #tpu.pipeline_mode<synchronous>, transform_indices = @transform_1, window_bounds = array<i64: 39, 32>}, {pipeline_mode = #tpu.pipeline_mode<synchronous>, transform_indices = @transform_2, window_bounds = array<i64: 32, 96>}, {pipeline_mode = #tpu.pipeline_mode<synchronous>, transform_indices = @transform_3, window_bounds = array<i64: 1, 96>}, {pipeline_mode = #tpu.pipeline_mode<synchronous>, transform_indices = @transform_4, window_bounds = array<i64: 32, 32>}, {pipeline_mode = #tpu.pipeline_mode<synchronous>, transform_indices = @transform_5, window_bounds = array<i64: 32, 64>}, {pipeline_mode = #tpu.pipeline_mode<synchronous>, transform_indices = @transform_6, window_bounds = array<i64: 1, 64>}, {pipeline_mode = #tpu.pipeline_mode<synchronous>, transform_indices = @transform_7, window_bounds = array<i64: 1, 64>}, {pipeline_mode = #tpu.pipeline_mode<synchronous>, transform_indices = @transform_8, window_bounds = array<i64: 1, 1>}, {transform_indices = @transform_9, window_bounds = array<i64: 1, 8>}]} {
    %c0 = arith.constant 0 : index
    %c0_0 = arith.constant 0 : index
    %c0_1 = arith.constant 0 : index
    %0 = vector.load %arg1[%c0, %c0_0, %c0_1] : memref<3x8x39xf32, #tpu.memory_space<vmem>>, vector<1x8x39xf32>
    %1 = vector.shape_cast %0 : vector<1x8x39xf32> to vector<8x39xf32>
    %c1 = arith.constant 1 : index
    %c0_2 = arith.constant 0 : index
    %c0_3 = arith.constant 0 : index
    %2 = vector.load %arg1[%c1, %c0_2, %c0_3] : memref<3x8x39xf32, #tpu.memory_space<vmem>>, vector<1x8x39xf32>
    %3 = vector.shape_cast %2 : vector<1x8x39xf32> to vector<8x39xf32>
    %c2 = arith.constant 2 : index
    %c0_4 = arith.constant 0 : index
    %c0_5 = arith.constant 0 : index
    %4 = vector.load %arg1[%c2, %c0_4, %c0_5] : memref<3x8x39xf32, #tpu.memory_space<vmem>>, vector<1x8x39xf32>
    %5 = vector.shape_cast %4 : vector<1x8x39xf32> to vector<8x39xf32>
    %6 = tpu.concatenate %1, %3, %5 in 0 : vector<8x39xf32>, vector<8x39xf32>, vector<8x39xf32> -> vector<24x39xf32>
    %c0_6 = arith.constant 0 : index
    %c0_7 = arith.constant 0 : index
    %7 = vector.load %arg2[%c0_6, %c0_7] : memref<39x32xf32, #tpu.memory_space<vmem>>, vector<39x32xf32>
    %cst = arith.constant dense<0.000000e+00> : vector<24x32xf32>
    %8 = tpu.matmul %6, %7, %cst {dimension_numbers = #tpu.dot_dimension_numbers<[1], [0], [0], [1], [0, 0, 1, 1], [], []>} : vector<24x39xf32>, vector<39x32xf32>, vector<24x32xf32> -> vector<24x32xf32>
    %cst_8 = arith.constant 0.000000e+00 : f32
    %9 = vector.broadcast %cst_8 : f32 to vector<24x32xf32>
    %10 = arith.maximumf %8, %9 : vector<24x32xf32>
    %c0_9 = arith.constant 0 : index
    %c0_10 = arith.constant 0 : index
    %11 = vector.load %arg3[%c0_9, %c0_10] : memref<32x96xf32, #tpu.memory_space<vmem>>, vector<32x96xf32>
    %cst_11 = arith.constant dense<0.000000e+00> : vector<24x96xf32>
    %12 = tpu.matmul %10, %11, %cst_11 {dimension_numbers = #tpu.dot_dimension_numbers<[1], [0], [0], [1], [0, 0, 1, 1], [], []>} : vector<24x32xf32>, vector<32x96xf32>, vector<24x96xf32> -> vector<24x96xf32>
    %c0_12 = arith.constant 0 : index
    %c0_13 = arith.constant 0 : index
    %13 = vector.load %arg4[%c0_12, %c0_13] : memref<1x96xf32, #tpu.memory_space<vmem>>, vector<1x96xf32>
    %14 = vector.broadcast %13 : vector<1x96xf32> to vector<24x96xf32>
    %15 = arith.addf %12, %14 : vector<24x96xf32>
    %16 = vector.extract_strided_slice %15 {offsets = [0, 0], sizes = [8, 32], strides = [1, 1]} : vector<24x96xf32> to vector<8x32xf32>
    %17 = vector.extract_strided_slice %15 {offsets = [8, 0], sizes = [8, 32], strides = [1, 1]} : vector<24x96xf32> to vector<8x32xf32>
    %18 = vector.extract_strided_slice %15 {offsets = [16, 0], sizes = [8, 32], strides = [1, 1]} : vector<24x96xf32> to vector<8x32xf32>
    %19 = vector.extract_strided_slice %15 {offsets = [0, 32], sizes = [8, 32], strides = [1, 1]} : vector<24x96xf32> to vector<8x32xf32>
    %20 = vector.extract_strided_slice %15 {offsets = [8, 32], sizes = [8, 32], strides = [1, 1]} : vector<24x96xf32> to vector<8x32xf32>
    %21 = vector.extract_strided_slice %15 {offsets = [16, 32], sizes = [8, 32], strides = [1, 1]} : vector<24x96xf32> to vector<8x32xf32>
    %22 = vector.extract_strided_slice %15 {offsets = [0, 64], sizes = [8, 32], strides = [1, 1]} : vector<24x96xf32> to vector<8x32xf32>
    %23 = vector.extract_strided_slice %15 {offsets = [8, 64], sizes = [8, 32], strides = [1, 1]} : vector<24x96xf32> to vector<8x32xf32>
    %24 = vector.extract_strided_slice %15 {offsets = [16, 64], sizes = [8, 32], strides = [1, 1]} : vector<24x96xf32> to vector<8x32xf32>
    %25 = arith.mulf %16, %19 : vector<8x32xf32>
    %26 = arith.mulf %16, %20 : vector<8x32xf32>
    %27 = arith.mulf %16, %21 : vector<8x32xf32>
    %28 = arith.mulf %17, %19 : vector<8x32xf32>
    %29 = arith.mulf %17, %20 : vector<8x32xf32>
    %30 = arith.mulf %17, %21 : vector<8x32xf32>
    %31 = arith.mulf %18, %19 : vector<8x32xf32>
    %32 = arith.mulf %18, %20 : vector<8x32xf32>
    %33 = arith.mulf %18, %21 : vector<8x32xf32>
    %34 = tpu.concatenate %25, %26, %27, %28, %29, %30, %31, %32, %33 in 0 : vector<8x32xf32>, vector<8x32xf32>, vector<8x32xf32>, vector<8x32xf32>, vector<8x32xf32>, vector<8x32xf32>, vector<8x32xf32>, vector<8x32xf32>, vector<8x32xf32> -> vector<72x32xf32>
    %c0_14 = arith.constant 0 : index
    %c0_15 = arith.constant 0 : index
    %35 = vector.load %arg5[%c0_14, %c0_15] : memref<32x32xf32, #tpu.memory_space<vmem>>, vector<32x32xf32>
    %cst_16 = arith.constant dense<0.000000e+00> : vector<72x32xf32>
    %36 = tpu.matmul %34, %35, %cst_16 {dimension_numbers = #tpu.dot_dimension_numbers<[1], [0], [0], [1], [0, 0, 1, 1], [], []>} : vector<72x32xf32>, vector<32x32xf32>, vector<72x32xf32> -> vector<72x32xf32>
    %37 = vector.extract_strided_slice %36 {offsets = [0, 0], sizes = [8, 32], strides = [1, 1]} : vector<72x32xf32> to vector<8x32xf32>
    %38 = vector.extract_strided_slice %36 {offsets = [8, 0], sizes = [8, 32], strides = [1, 1]} : vector<72x32xf32> to vector<8x32xf32>
    %39 = vector.extract_strided_slice %36 {offsets = [16, 0], sizes = [8, 32], strides = [1, 1]} : vector<72x32xf32> to vector<8x32xf32>
    %40 = arith.maximumf %37, %38 : vector<8x32xf32>
    %41 = arith.maximumf %40, %39 : vector<8x32xf32>
    %42 = arith.subf %37, %41 : vector<8x32xf32>
    %43 = math.exp %42 : vector<8x32xf32>
    %44 = arith.subf %38, %41 : vector<8x32xf32>
    %45 = math.exp %44 : vector<8x32xf32>
    %46 = arith.subf %39, %41 : vector<8x32xf32>
    %47 = math.exp %46 : vector<8x32xf32>
    %48 = arith.addf %43, %45 : vector<8x32xf32>
    %49 = arith.addf %48, %47 : vector<8x32xf32>
    %50 = tpu.reciprocal %49 {approx = true} : vector<8x32xf32> -> vector<8x32xf32>
    %51 = arith.mulf %43, %50 : vector<8x32xf32>
    %52 = arith.mulf %51, %22 : vector<8x32xf32>
    %53 = arith.mulf %45, %50 : vector<8x32xf32>
    %54 = arith.mulf %53, %23 : vector<8x32xf32>
    %55 = arith.addf %52, %54 : vector<8x32xf32>
    %56 = arith.mulf %47, %50 : vector<8x32xf32>
    %57 = arith.mulf %56, %24 : vector<8x32xf32>
    %58 = arith.addf %55, %57 : vector<8x32xf32>
    %59 = vector.extract_strided_slice %36 {offsets = [24, 0], sizes = [8, 32], strides = [1, 1]} : vector<72x32xf32> to vector<8x32xf32>
    %60 = vector.extract_strided_slice %36 {offsets = [32, 0], sizes = [8, 32], strides = [1, 1]} : vector<72x32xf32> to vector<8x32xf32>
    %61 = vector.extract_strided_slice %36 {offsets = [40, 0], sizes = [8, 32], strides = [1, 1]} : vector<72x32xf32> to vector<8x32xf32>
    %62 = arith.maximumf %59, %60 : vector<8x32xf32>
    %63 = arith.maximumf %62, %61 : vector<8x32xf32>
    %64 = arith.subf %59, %63 : vector<8x32xf32>
    %65 = math.exp %64 : vector<8x32xf32>
    %66 = arith.subf %60, %63 : vector<8x32xf32>
    %67 = math.exp %66 : vector<8x32xf32>
    %68 = arith.subf %61, %63 : vector<8x32xf32>
    %69 = math.exp %68 : vector<8x32xf32>
    %70 = arith.addf %65, %67 : vector<8x32xf32>
    %71 = arith.addf %70, %69 : vector<8x32xf32>
    %72 = tpu.reciprocal %71 {approx = true} : vector<8x32xf32> -> vector<8x32xf32>
    %73 = arith.mulf %65, %72 : vector<8x32xf32>
    %74 = arith.mulf %73, %22 : vector<8x32xf32>
    %75 = arith.mulf %67, %72 : vector<8x32xf32>
    %76 = arith.mulf %75, %23 : vector<8x32xf32>
    %77 = arith.addf %74, %76 : vector<8x32xf32>
    %78 = arith.mulf %69, %72 : vector<8x32xf32>
    %79 = arith.mulf %78, %24 : vector<8x32xf32>
    %80 = arith.addf %77, %79 : vector<8x32xf32>
    %81 = arith.addf %58, %80 : vector<8x32xf32>
    %82 = vector.extract_strided_slice %36 {offsets = [48, 0], sizes = [8, 32], strides = [1, 1]} : vector<72x32xf32> to vector<8x32xf32>
    %83 = vector.extract_strided_slice %36 {offsets = [56, 0], sizes = [8, 32], strides = [1, 1]} : vector<72x32xf32> to vector<8x32xf32>
    %84 = vector.extract_strided_slice %36 {offsets = [64, 0], sizes = [8, 32], strides = [1, 1]} : vector<72x32xf32> to vector<8x32xf32>
    %85 = arith.maximumf %82, %83 : vector<8x32xf32>
    %86 = arith.maximumf %85, %84 : vector<8x32xf32>
    %87 = arith.subf %82, %86 : vector<8x32xf32>
    %88 = math.exp %87 : vector<8x32xf32>
    %89 = arith.subf %83, %86 : vector<8x32xf32>
    %90 = math.exp %89 : vector<8x32xf32>
    %91 = arith.subf %84, %86 : vector<8x32xf32>
    %92 = math.exp %91 : vector<8x32xf32>
    %93 = arith.addf %88, %90 : vector<8x32xf32>
    %94 = arith.addf %93, %92 : vector<8x32xf32>
    %95 = tpu.reciprocal %94 {approx = true} : vector<8x32xf32> -> vector<8x32xf32>
    %96 = arith.mulf %88, %95 : vector<8x32xf32>
    %97 = arith.mulf %96, %22 : vector<8x32xf32>
    %98 = arith.mulf %90, %95 : vector<8x32xf32>
    %99 = arith.mulf %98, %23 : vector<8x32xf32>
    %100 = arith.addf %97, %99 : vector<8x32xf32>
    %101 = arith.mulf %92, %95 : vector<8x32xf32>
    %102 = arith.mulf %101, %24 : vector<8x32xf32>
    %103 = arith.addf %100, %102 : vector<8x32xf32>
    %104 = arith.addf %81, %103 : vector<8x32xf32>
    %c0_17 = arith.constant 0 : index
    %c0_18 = arith.constant 0 : index
    %105 = vector.load %arg6[%c0_17, %c0_18] : memref<32x64xf32, #tpu.memory_space<vmem>>, vector<32x64xf32>
    %cst_19 = arith.constant dense<0.000000e+00> : vector<8x64xf32>
    %106 = tpu.matmul %104, %105, %cst_19 {dimension_numbers = #tpu.dot_dimension_numbers<[1], [0], [0], [1], [0, 0, 1, 1], [], []>} : vector<8x32xf32>, vector<32x64xf32>, vector<8x64xf32> -> vector<8x64xf32>
    %c0_20 = arith.constant 0 : index
    %c0_21 = arith.constant 0 : index
    %107 = vector.load %arg7[%c0_20, %c0_21] : memref<1x64xf32, #tpu.memory_space<vmem>>, vector<1x64xf32>
    %108 = vector.broadcast %107 : vector<1x64xf32> to vector<8x64xf32>
    %109 = arith.addf %106, %108 : vector<8x64xf32>
    %cst_22 = arith.constant 0.000000e+00 : f32
    %110 = vector.broadcast %cst_22 : f32 to vector<8x64xf32>
    %111 = arith.maximumf %109, %110 : vector<8x64xf32>
    %c0_23 = arith.constant 0 : index
    %c0_24 = arith.constant 0 : index
    %112 = vector.load %arg8[%c0_23, %c0_24] : memref<1x64xf32, #tpu.memory_space<vmem>>, vector<1x64xf32>
    %cst_25 = arith.constant dense<0.000000e+00> : vector<1x8xf32>
    %113 = tpu.matmul %112, %111, %cst_25 {dimension_numbers = #tpu.dot_dimension_numbers<[1], [1], [0], [0], [0, 0, 1, 0], [], []>} : vector<1x64xf32>, vector<8x64xf32>, vector<1x8xf32> -> vector<1x8xf32>
    %c0_26 = arith.constant 0 : index
    %c0_27 = arith.constant 0 : index
    %114 = vector.load %arg9[%c0_26, %c0_27] : memref<1x1xf32, #tpu.memory_space<vmem>>, vector<1x1xf32>
    %115 = vector.broadcast %114 : vector<1x1xf32> to vector<1x8xf32>
    %116 = arith.addf %113, %115 : vector<1x8xf32>
    %c0_28 = arith.constant 0 : index
    %c0_29 = arith.constant 0 : index
    %117 = vector.load %arg10[%c0_28, %c0_29] : memref<1x8xf32, #tpu.memory_space<vmem>>, vector<1x8xf32>
    tpu.vector_store %arg10[%c0_28, %c0_29], %116 {strides = array<i32>} : memref<1x8xf32, #tpu.memory_space<vmem>>, vector<1x8xf32>,
    return
  }
  func.func @transform_0(%arg0: i32) -> (i32, i32, i32) {
    %c0_i32 = arith.constant 0 : i32
    %c0_i32_0 = arith.constant 0 : i32
    %c0_i32_1 = arith.constant 0 : i32
    return %c0_i32, %arg0, %c0_i32_0 : i32, i32, i32
  }
  func.func @transform_1(%arg0: i32) -> (i32, i32) {
    %c0_i32 = arith.constant 0 : i32
    %c0_i32_0 = arith.constant 0 : i32
    %c0_i32_1 = arith.constant 0 : i32
    return %c0_i32, %c0_i32_0 : i32, i32
  }
  func.func @transform_2(%arg0: i32) -> (i32, i32) {
    %c0_i32 = arith.constant 0 : i32
    %c0_i32_0 = arith.constant 0 : i32
    %c0_i32_1 = arith.constant 0 : i32
    return %c0_i32, %c0_i32_0 : i32, i32
  }
  func.func @transform_3(%arg0: i32) -> (i32, i32) {
    %c0_i32 = arith.constant 0 : i32
    %c0_i32_0 = arith.constant 0 : i32
    %c0_i32_1 = arith.constant 0 : i32
    return %c0_i32, %c0_i32_0 : i32, i32
  }
  func.func @transform_4(%arg0: i32) -> (i32, i32) {
    %c0_i32 = arith.constant 0 : i32
    %c0_i32_0 = arith.constant 0 : i32
    %c0_i32_1 = arith.constant 0 : i32
    return %c0_i32, %c0_i32_0 : i32, i32
  }
  func.func @transform_5(%arg0: i32) -> (i32, i32) {
    %c0_i32 = arith.constant 0 : i32
    %c0_i32_0 = arith.constant 0 : i32
    %c0_i32_1 = arith.constant 0 : i32
    return %c0_i32, %c0_i32_0 : i32, i32
  }
  func.func @transform_6(%arg0: i32) -> (i32, i32) {
    %c0_i32 = arith.constant 0 : i32
    %c0_i32_0 = arith.constant 0 : i32
    %c0_i32_1 = arith.constant 0 : i32
    return %c0_i32, %c0_i32_0 : i32, i32
  }
  func.func @transform_7(%arg0: i32) -> (i32, i32) {
    %c0_i32 = arith.constant 0 : i32
    %c0_i32_0 = arith.constant 0 : i32
    %c0_i32_1 = arith.constant 0 : i32
    return %c0_i32, %c0_i32_0 : i32, i32
  }
  func.func @transform_8(%arg0: i32) -> (i32, i32) {
    %c0_i32 = arith.constant 0 : i32
    %c0_i32_0 = arith.constant 0 : i32
    %c0_i32_1 = arith.constant 0 : i32
    return %c0_i32, %c0_i32_0 : i32, i32
  }
  func.func @transform_9(%arg0: i32) -> (i32, i32) {
    %c0_i32 = arith.constant 0 : i32
    %c0_i32_0 = arith.constant 0 : i32
    return %c0_i32, %arg0 : i32, i32
  }
}

</mosaic_0001>

<llo_original>
// kernel: tpu_custom_call.1
$region0: #{tpu_custom_call.1}
  #allocation0 [shape = 'u32[]', space=smem, size = 0x4, offset = 0x4, fixed_abs, tag = 'smem constant byte address 0x4 - core index']
  #allocation1 [shape = 'u32[144,128]{1,0:T(1,128)}', space=vmem, size = 0x12000, scoped, tag = 'internal scratch']
  #allocation2 [shape = 'f32[1,1]{1,0:T(1,128)S(1)}', space=vmem, size = 0x200, scoped, tag = 'scoped memory for tpu_custom_call.1']
  %s0 = inlined_call_operand.hbm [shape: f32[3,8,39], index: 0, kind: input, shape index: {}]
  %s1 = inlined_call_operand.vmem [shape: f32[39,32], index: 1, kind: input, shape index: {}]
  %s2 = inlined_call_operand.vmem [shape: f32[32,96], index: 2, kind: input, shape index: {}]
  %s3 = inlined_call_operand.vmem [shape: f32[1,96], index: 3, kind: input, shape index: {}]
  %s4 = inlined_call_operand.vmem [shape: f32[32,32], index: 4, kind: input, shape index: {}]
  %s5 = inlined_call_operand.hbm [shape: f32[32,64], index: 5, kind: input, shape index: {}]
  %s6 = inlined_call_operand.vmem [shape: f32[1,64], index: 6, kind: input, shape index: {}]
  %s7 = inlined_call_operand.vmem [shape: f32[1,64], index: 7, kind: input, shape index: {}]
  %s8 = inlined_call_operand.<no memory space> [shape: f32[1,1], index: 8, kind: input, shape index: {}]
  %s9 = inlined_call_operand.hbm [shape: f32[1,8], index: 9, kind: output, shape index: {}]
  %s10 = sld [smem:[#allocation0]]
  $region54: #{tpu_custom_call.1} parent=0
    _
  %s12 = ssub.s32 1, %s10
  %s13 = scalar_select 0, %s12, %s10
  %v14 = vstv %s8
  %15 = vst [vmem:[#allocation2] sm:$0x1] %v14
  $region1: #{tpu_custom_call.1} parent=0
    #allocation3 [shape = 'u8[12288]{0}', space=vmem, size = 0x3000, scoped, tag = 'input window, operand 0, single buffered']
    #allocation4 [shape = 's32[1]{0}', space=sflag, size = 0x4, scoped, tag = 'scoped memory for tpu_custom_call.1']
    #allocation5 [shape = 's32[1]{0}', space=sflag, size = 0x4, scoped, tag = 'scoped memory for tpu_custom_call.1']
    #allocation6 [shape = 'u8[16384]{0}', space=vmem, size = 0x4000, scoped, tag = 'input window, operand 5, single buffered']
    #allocation7 [shape = 's32[1]{0}', space=sflag, size = 0x4, scoped, tag = 'scoped memory for tpu_custom_call.1']
    #allocation8 [shape = 'u8[512]{0}', space=vmem, size = 0x400, scoped, tag = 'output window, operand 0, single buffered']
    %16 = vsyncpa [#allocation4], 0
    %17 = vsyncpa [#allocation7], 0
    %18 = vsyncpa [#allocation5], 0
    // Predicated region
    $region2: #{tpu_custom_call.1} parent=1 // pred_check
      _
    $region3: #{tpu_custom_call.1} parent=1 // pred_check_branch
      %20 = sbr.rel (0) target = $region5
    $region4: #{tpu_custom_call.1} parent=1 // pred_region
      %s22 = ssub.s32 384, 384
      %23 = vsyncadd [#allocation4], %s22
      %s24 = sshll.u32 [#allocation3], 4
      %s25 = int_to_ptr.vmem [resolvable:$true] %s24
      %30 = dma.hbm_to_vmem [thread:$0]  %s0, 384, %s25, [#allocation4], 128, 128, 8
    $region5: #{tpu_custom_call.1} parent=1 // pred_fallthru
      _
    // Predicated region
    $region6: #{tpu_custom_call.1} parent=1 // pred_check
      _
    $region7: #{tpu_custom_call.1} parent=1 // pred_check_branch
      %32 = sbr.rel (0) target = $region9
    $region8: #{tpu_custom_call.1} parent=1 // pred_region
      _
    $region9: #{tpu_custom_call.1} parent=1 // pred_fallthru
      _
    // Predicated region
    $region10: #{tpu_custom_call.1} parent=1 // pred_check
      _
    $region11: #{tpu_custom_call.1} parent=1 // pred_check_branch
      %34 = sbr.rel (0) target = $region13
    $region12: #{tpu_custom_call.1} parent=1 // pred_region
      _
    $region13: #{tpu_custom_call.1} parent=1 // pred_fallthru
      _
    // Predicated region
    $region14: #{tpu_custom_call.1} parent=1 // pred_check
      _
    $region15: #{tpu_custom_call.1} parent=1 // pred_check_branch
      %36 = sbr.rel (0) target = $region17
    $region16: #{tpu_custom_call.1} parent=1 // pred_region
      _
    $region17: #{tpu_custom_call.1} parent=1 // pred_fallthru
      _
    // Predicated region
    $region18: #{tpu_custom_call.1} parent=1 // pred_check
      _
    $region19: #{tpu_custom_call.1} parent=1 // pred_check_branch
      %38 = sbr.rel (0) target = $region21
    $region20: #{tpu_custom_call.1} parent=1 // pred_region
      _
    $region21: #{tpu_custom_call.1} parent=1 // pred_fallthru
      _
    // Predicated region
    $region22: #{tpu_custom_call.1} parent=1 // pred_check
      _
    $region23: #{tpu_custom_call.1} parent=1 // pred_check_branch
      %40 = sbr.rel (0) target = $region25
    $region24: #{tpu_custom_call.1} parent=1 // pred_region
      %s42 = ssub.s32 512, 512
      %43 = vsyncadd [#allocation7], %s42
      %s44 = sshll.u32 [#allocation6], 4
      %s45 = int_to_ptr.vmem [resolvable:$true] %s44
      %50 = dma.hbm_to_vmem [thread:$0]  %s5, 512, %s45, [#allocation7], 128, 128, 8
    $region25: #{tpu_custom_call.1} parent=1 // pred_fallthru
      _
    // Predicated region
    $region26: #{tpu_custom_call.1} parent=1 // pred_check
      _
    $region27: #{tpu_custom_call.1} parent=1 // pred_check_branch
      %52 = sbr.rel (0) target = $region29
    $region28: #{tpu_custom_call.1} parent=1 // pred_region
      _
    $region29: #{tpu_custom_call.1} parent=1 // pred_fallthru
      _
    // Predicated region
    $region30: #{tpu_custom_call.1} parent=1 // pred_check
      _
    $region31: #{tpu_custom_call.1} parent=1 // pred_check_branch
      %54 = sbr.rel (0) target = $region33
    $region32: #{tpu_custom_call.1} parent=1 // pred_region
      _
    $region33: #{tpu_custom_call.1} parent=1 // pred_fallthru
      _
    // Predicated region
    $region34: #{tpu_custom_call.1} parent=1 // pred_check
      _
    $region35: #{tpu_custom_call.1} parent=1 // pred_check_branch
      %56 = sbr.rel (0) target = $region37
    $region36: #{tpu_custom_call.1} parent=1 // pred_region
      _
    $region37: #{tpu_custom_call.1} parent=1 // pred_fallthru
      _
    // Predicated region
    $region38: #{tpu_custom_call.1} parent=1 // pred_check
      _
    $region39: #{tpu_custom_call.1} parent=1 // pred_check_branch
      %58 = sbr.rel (0) target = $region41
    $region40: #{tpu_custom_call.1} parent=1 // pred_region
      %59 = dma.done [#allocation4], 384
    $region41: #{tpu_custom_call.1} parent=1 // pred_fallthru
      _
    // Predicated region
    $region42: #{tpu_custom_call.1} parent=1 // pred_check
      _
    $region43: #{tpu_custom_call.1} parent=1 // pred_check_branch
      %61 = sbr.rel (0) target = $region45
    $region44: #{tpu_custom_call.1} parent=1 // pred_region
      %62 = dma.done [#allocation7], 512
    $region45: #{tpu_custom_call.1} parent=1 // pred_fallthru
      _
    %v63 = vld [vmem:[#allocation3] sm:$0xff]
    %s64 = scalar_lea.vmem [#allocation3], 8
    %v65 = vld [vmem:[%s64] sm:$0xff]
    %s66 = scalar_lea.vmem [#allocation3], 16
    %v67 = vld [vmem:[%s66] sm:$0xff]
    %v68 = vld [vmem:[%s1] sm:$0xff]
    %v69 = vld [vmem:[%s1 + $0x8] sm:$0xff]
    %v70 = vld [vmem:[%s1 + $0x10] sm:$0xff]
    %v71 = vld [vmem:[%s1 + $0x18] sm:$0xff]
    %v72 = vld [vmem:[%s1 + $0x20] sm:$0x7f]
    %vm73 = vcmask 318464
    %v75 = vsel %vm73, %v63, 0
    %v78 = vsel %vm73, %v65, 0
    %v81 = vsel %vm73, %v67, 0
    %vm83 = vcmask 1046528
    %v85 = vsel %vm83, %v72, 0
    %87 = vmatprep.subr.mxu0 0.0
    %88 = vmatpush1.msra.mxu0 %v68
    %89 = vmatprep.subr.mxu0 0.0
    %90 = vmatpush1.msra.mxu0 %v69
    %91 = vmatprep.subr.mxu0 0.0
    %92 = vmatpush1.msra.mxu0 %v70
    %93 = vmatprep.subr.mxu0 0.0
    %94 = vmatpush1.msra.mxu0 %v71
    %95 = vmatprep.subr.mxu0 0.0
    %96 = vmatpush1.msra.mxu0 %v85
    %97 = vmatprep.subr.mxu0 0.0
    %98 = vmatpush1.msra.mxu0 0.0
    %99 = vmatprep.subr.mxu0 0.0
    %100 = vmatpush1.msra.mxu0 0.0
    %101 = vmatprep.subr.mxu0 0.0
    %102 = vmatpush1.msra.mxu0 0.0
    %103 = vmatprep.subr.mxu0 0.0
    %104 = vmatpush1.msra.mxu0 0.0
    %105 = vmatprep.subr.mxu0 0.0
    %106 = vmatpush1.msra.mxu0 0.0
    %107 = vmatprep.subr.mxu0 0.0
    %108 = vmatpush1.msra.mxu0 0.0
    %109 = vmatprep.subr.mxu0 0.0
    %110 = vmatpush1.msra.mxu0 0.0
    %111 = vmatprep.subr.mxu0 0.0
    %112 = vmatpush1.msra.mxu0 0.0
    %113 = vmatprep.subr.mxu0 0.0
    %114 = vmatpush1.msra.mxu0 0.0
    %115 = vmatprep.subr.mxu0 0.0
    %116 = vmatpush1.msra.mxu0 0.0
    %117 = vmatprep.subr.mxu0 0.0
    %118 = vmatpush1.msra.mxu0 0.0
    %119 = vmatprep.subr.mxu0 0.0
    %120 = vmatpush1.msra.mxu0 0.0
    %121 = vmatprep.subr.mxu0 0.0
    %122 = vmatpush1.msra.mxu0 0.0
    %123 = vmatprep.subr.mxu0 0.0
    %124 = vmatpush1.msra.mxu0 0.0
    %125 = vmatprep.subr.mxu0 0.0
    %126 = vmatpush1.msra.mxu0 0.0
    %127 = vmatprep.subr.mxu0 0.0
    %128 = vmatpush1.msra.mxu0 0.0
    %129 = vmatprep.subr.mxu0 0.0
    %130 = vmatpush1.msra.mxu0 0.0
    %131 = vmatprep.subr.mxu0 0.0
    %132 = vmatpush1.msra.mxu0 0.0
    %133 = vmatprep.subr.mxu0 0.0
    %134 = vmatpush1.msra.mxu0 0.0
    %135 = vmatprep.subr.mxu0 0.0
    %136 = vmatpush1.msra.mxu0 0.0
    %137 = vmatprep.subr.mxu0 0.0
    %138 = vmatpush1.msra.mxu0 0.0
    %139 = vmatprep.subr.mxu0 0.0
    %140 = vmatpush1.msra.mxu0 0.0
    %141 = vmatprep.subr.mxu0 0.0
    %142 = vmatpush1.msra.mxu0 0.0
    %143 = vmatprep.subr.mxu0 0.0
    %144 = vmatpush1.msra.mxu0 0.0
    %145 = vmatprep.subr.mxu0 0.0
    %146 = vmatpush1.msra.mxu0 0.0
    %147 = vmatprep.subr.mxu0 0.0
    %148 = vmatpush1.msra.mxu0 0.0
    %149 = vmatprep.subr.mxu0 0.0
    %150 = vmatpush1.msra.mxu0 0.0
    %151 = vmatprep.mubr.f32.mxu0 0.0
    %152 = vmatmul.mubr.f32.gmra.mrb[0].mxu0 %v75
    %v153 = vpop.f32.mrb[0].mxu0
    %v154 = vadd.f32 0.0, %v153
    %v155 = vpop.f32.mrb[0].mxu0
    %156 = vmatprep.mubr.f32.mxu0 0.0
    %157 = vmatmul.mubr.f32.gmra.mrb[0].mxu0 %v78
    %v158 = vpop.f32.mrb[0].mxu0
    %v159 = vadd.f32 0.0, %v158
    %v160 = vpop.f32.mrb[0].mxu0
    %161 = vmatprep.mubr.f32.mxu0 0.0
    %162 = vmatmul.mubr.f32.gmra.mrb[0].mxu0 %v81
    %v163 = vpop.f32.mrb[0].mxu0
    %v164 = vadd.f32 0.0, %v163
    %v165 = vpop.f32.mrb[0].mxu0
    %166 = vdwg.mxu0
    %v167 = vmax.f32 %v154, 0.0
    %v168 = vmax.f32 %v159, 0.0
    %v169 = vmax.f32 %v164, 0.0
    %v170 = vld [vmem:[%s2] sm:$0xff]
    %v171 = vld [vmem:[%s2 + $0x8] sm:$0xff]
    %v172 = vld [vmem:[%s2 + $0x10] sm:$0xff]
    %v173 = vld [vmem:[%s2 + $0x18] sm:$0xff]
    %v174 = vld [vmem:[%s3] sm:$0x1]
    %v176 = vlaneseq
    %v177 = vshrl.u32 %v176, 7
    %v178 = vsub.s32 0, %v177
    %v179 = vrot.slane %v174, %v178
    %vm181 = vcmask 261120
    %v183 = vsel %vm181, %v167, 0
    %v186 = vsel %vm181, %v168, 0
    %v189 = vsel %vm181, %v169, 0
    %191 = vmatprep.subr.mxu0 0.0
    %192 = vmatpush1.msra.mxu0 %v170
    %193 = vmatprep.subr.mxu0 0.0
    %194 = vmatpush1.msra.mxu0 %v171
    %195 = vmatprep.subr.mxu0 0.0
    %196 = vmatpush1.msra.mxu0 %v172
    %197 = vmatprep.subr.mxu0 0.0
    %198 = vmatpush1.msra.mxu0 %v173
    %199 = vmatprep.subr.mxu0 0.0
    %200 = vmatpush1.msra.mxu0 0.0
    %201 = vmatprep.subr.mxu0 0.0
    %202 = vmatpush1.msra.mxu0 0.0
    %203 = vmatprep.subr.mxu0 0.0
    %204 = vmatpush1.msra.mxu0 0.0
    %205 = vmatprep.subr.mxu0 0.0
    %206 = vmatpush1.msra.mxu0 0.0
    %207 = vmatprep.subr.mxu0 0.0
    %208 = vmatpush1.msra.mxu0 0.0
    %209 = vmatprep.subr.mxu0 0.0
    %210 = vmatpush1.msra.mxu0 0.0
    %211 = vmatprep.subr.mxu0 0.0
    %212 = vmatpush1.msra.mxu0 0.0
    %213 = vmatprep.subr.mxu0 0.0
    %214 = vmatpush1.msra.mxu0 0.0
    %215 = vmatprep.subr.mxu0 0.0
    %216 = vmatpush1.msra.mxu0 0.0
    %217 = vmatprep.subr.mxu0 0.0
    %218 = vmatpush1.msra.mxu0 0.0
    %219 = vmatprep.subr.mxu0 0.0
    %220 = vmatpush1.msra.mxu0 0.0
    %221 = vmatprep.subr.mxu0 0.0
    %222 = vmatpush1.msra.mxu0 0.0
    %223 = vmatprep.subr.mxu0 0.0
    %224 = vmatpush1.msra.mxu0 0.0
    %225 = vmatprep.subr.mxu0 0.0
    %226 = vmatpush1.msra.mxu0 0.0
    %227 = vmatprep.subr.mxu0 0.0
    %228 = vmatpush1.msra.mxu0 0.0
    %229 = vmatprep.subr.mxu0 0.0
    %230 = vmatpush1.msra.mxu0 0.0
    %231 = vmatprep.subr.mxu0 0.0
    %232 = vmatpush1.msra.mxu0 0.0
    %233 = vmatprep.subr.mxu0 0.0
    %234 = vmatpush1.msra.mxu0 0.0
    %235 = vmatprep.subr.mxu0 0.0
    %236 = vmatpush1.msra.mxu0 0.0
    %237 = vmatprep.subr.mxu0 0.0
    %238 = vmatpush1.msra.mxu0 0.0
    %239 = vmatprep.subr.mxu0 0.0
    %240 = vmatpush1.msra.mxu0 0.0
    %241 = vmatprep.subr.mxu0 0.0
    %242 = vmatpush1.msra.mxu0 0.0
    %243 = vmatprep.subr.mxu0 0.0
    %244 = vmatpush1.msra.mxu0 0.0
    %245 = vmatprep.subr.mxu0 0.0
    %246 = vmatpush1.msra.mxu0 0.0
    %247 = vmatprep.subr.mxu0 0.0
    %248 = vmatpush1.msra.mxu0 0.0
    %249 = vmatprep.subr.mxu0 0.0
    %250 = vmatpush1.msra.mxu0 0.0
    %251 = vmatprep.subr.mxu0 0.0
    %252 = vmatpush1.msra.mxu0 0.0
    %253 = vmatprep.subr.mxu0 0.0
    %254 = vmatpush1.msra.mxu0 0.0
    %255 = vmatprep.mubr.f32.mxu0 0.0
    %256 = vmatmul.mubr.f32.gmra.mrb[0].mxu0 %v183
    %v257 = vpop.f32.mrb[0].mxu0
    %v258 = vadd.f32 %v179, %v257
    %v259 = vpop.f32.mrb[0].mxu0
    %260 = vmatprep.mubr.f32.mxu0 0.0
    %261 = vmatmul.mubr.f32.gmra.mrb[0].mxu0 %v186
    %v262 = vpop.f32.mrb[0].mxu0
    %v263 = vadd.f32 %v179, %v262
    %v264 = vpop.f32.mrb[0].mxu0
    %265 = vmatprep.mubr.f32.mxu0 0.0
    %266 = vmatmul.mubr.f32.gmra.mrb[0].mxu0 %v189
    %v267 = vpop.f32.mrb[0].mxu0
    %v268 = vadd.f32 %v179, %v267
    %v269 = vpop.f32.mrb[0].mxu0
    %270 = vdwg.mxu0
    %272 = vrot.lane.b32.xlu0 %v258, 96
    %v273 = vpop.permute.xlu0 %272
    %v275 = vmul.f32 %v258, %v273
    %277 = vrot.lane.b32.xlu0 %v263, 96
    %v278 = vpop.permute.xlu0 %277
    %v280 = vmul.f32 %v258, %v278
    %282 = vrot.lane.b32.xlu0 %v268, 96
    %v283 = vpop.permute.xlu0 %282
    %v285 = vmul.f32 %v258, %v283
    %v286 = vmul.f32 %v263, %v273
    %v287 = vmul.f32 %v263, %v278
    %v288 = vmul.f32 %v263, %v283
    %v289 = vmul.f32 %v268, %v273
    %v290 = vmul.f32 %v268, %v278
    %v291 = vmul.f32 %v268, %v283
    %v292 = vld [vmem:[%s4] sm:$0xff]
    %v293 = vld [vmem:[%s4 + $0x8] sm:$0xff]
    %v294 = vld [vmem:[%s4 + $0x10] sm:$0xff]
    %v295 = vld [vmem:[%s4 + $0x18] sm:$0xff]
    %v297 = vsel %vm181, %v275, 0
    %v300 = vsel %vm181, %v280, 0
    %v303 = vsel %vm181, %v285, 0
    %v306 = vsel %vm181, %v286, 0
    %v309 = vsel %vm181, %v287, 0
    %v312 = vsel %vm181, %v288, 0
    %v315 = vsel %vm181, %v289, 0
    %v318 = vsel %vm181, %v290, 0
    %v321 = vsel %vm181, %v291, 0
    %323 = vmatprep.subr.mxu0 0.0
    %324 = vmatpush1.msra.mxu0 %v292
    %325 = vmatprep.subr.mxu0 0.0
    %326 = vmatpush1.msra.mxu0 %v293
    %327 = vmatprep.subr.mxu0 0.0
    %328 = vmatpush1.msra.mxu0 %v294
    %329 = vmatprep.subr.mxu0 0.0
    %330 = vmatpush1.msra.mxu0 %v295
    %331 = vmatprep.subr.mxu0 0.0
    %332 = vmatpush1.msra.mxu0 0.0
    %333 = vmatprep.subr.mxu0 0.0
    %334 = vmatpush1.msra.mxu0 0.0
    %335 = vmatprep.subr.mxu0 0.0
    %336 = vmatpush1.msra.mxu0 0.0
    %337 = vmatprep.subr.mxu0 0.0
    %338 = vmatpush1.msra.mxu0 0.0
    %339 = vmatprep.subr.mxu0 0.0
    %340 = vmatpush1.msra.mxu0 0.0
    %341 = vmatprep.subr.mxu0 0.0
    %342 = vmatpush1.msra.mxu0 0.0
    %343 = vmatprep.subr.mxu0 0.0
    %344 = vmatpush1.msra.mxu0 0.0
    %345 = vmatprep.subr.mxu0 0.0
    %346 = vmatpush1.msra.mxu0 0.0
    %347 = vmatprep.subr.mxu0 0.0
    %348 = vmatpush1.msra.mxu0 0.0
    %349 = vmatprep.subr.mxu0 0.0
    %350 = vmatpush1.msra.mxu0 0.0
    %351 = vmatprep.subr.mxu0 0.0
    %352 = vmatpush1.msra.mxu0 0.0
    %353 = vmatprep.subr.mxu0 0.0
    %354 = vmatpush1.msra.mxu0 0.0
    %355 = vmatprep.subr.mxu0 0.0
    %356 = vmatpush1.msra.mxu0 0.0
    %357 = vmatprep.subr.mxu0 0.0
    %358 = vmatpush1.msra.mxu0 0.0
    %359 = vmatprep.subr.mxu0 0.0
    %360 = vmatpush1.msra.mxu0 0.0
    %361 = vmatprep.subr.mxu0 0.0
    %362 = vmatpush1.msra.mxu0 0.0
    %363 = vmatprep.subr.mxu0 0.0
    %364 = vmatpush1.msra.mxu0 0.0
    %365 = vmatprep.subr.mxu0 0.0
    %366 = vmatpush1.msra.mxu0 0.0
    %367 = vmatprep.subr.mxu0 0.0
    %368 = vmatpush1.msra.mxu0 0.0
    %369 = vmatprep.subr.mxu0 0.0
    %370 = vmatpush1.msra.mxu0 0.0
    %371 = vmatprep.subr.mxu0 0.0
    %372 = vmatpush1.msra.mxu0 0.0
    %373 = vmatprep.subr.mxu0 0.0
    %374 = vmatpush1.msra.mxu0 0.0
    %375 = vmatprep.subr.mxu0 0.0
    %376 = vmatpush1.msra.mxu0 0.0
    %377 = vmatprep.subr.mxu0 0.0
    %378 = vmatpush1.msra.mxu0 0.0
    %379 = vmatprep.subr.mxu0 0.0
    %380 = vmatpush1.msra.mxu0 0.0
    %381 = vmatprep.subr.mxu0 0.0
    %382 = vmatpush1.msra.mxu0 0.0
    %383 = vmatprep.subr.mxu0 0.0
    %384 = vmatpush1.msra.mxu0 0.0
    %385 = vmatprep.subr.mxu0 0.0
    %386 = vmatpush1.msra.mxu0 0.0
    %387 = vmatprep.mubr.f32.mxu0 0.0
    %388 = vmatmul.mubr.f32.gmra.mrb[0].mxu0 %v297
    %v389 = vpop.f32.mrb[0].mxu0
    %v390 = vadd.f32 0.0, %v389
    %v391 = vpop.f32.mrb[0].mxu0
    %392 = vmatprep.mubr.f32.mxu0 0.0
    %393 = vmatmul.mubr.f32.gmra.mrb[0].mxu0 %v300
    %v394 = vpop.f32.mrb[0].mxu0
    %v395 = vadd.f32 0.0, %v394
    %v396 = vpop.f32.mrb[0].mxu0
    %397 = vmatprep.mubr.f32.mxu0 0.0
    %398 = vmatmul.mubr.f32.gmra.mrb[0].mxu0 %v303
    %v399 = vpop.f32.mrb[0].mxu0
    %v400 = vadd.f32 0.0, %v399
    %v401 = vpop.f32.mrb[0].mxu0
    %402 = vmatprep.mubr.f32.mxu0 0.0
    %403 = vmatmul.mubr.f32.gmra.mrb[0].mxu0 %v306
    %v404 = vpop.f32.mrb[0].mxu0
    %v405 = vadd.f32 0.0, %v404
    %v406 = vpop.f32.mrb[0].mxu0
    %407 = vmatprep.mubr.f32.mxu0 0.0
    %408 = vmatmul.mubr.f32.gmra.mrb[0].mxu0 %v309
    %v409 = vpop.f32.mrb[0].mxu0
    %v410 = vadd.f32 0.0, %v409
    %v411 = vpop.f32.mrb[0].mxu0
    %412 = vmatprep.mubr.f32.mxu0 0.0
    %413 = vmatmul.mubr.f32.gmra.mrb[0].mxu0 %v312
    %v414 = vpop.f32.mrb[0].mxu0
    %v415 = vadd.f32 0.0, %v414
    %v416 = vpop.f32.mrb[0].mxu0
    %417 = vmatprep.mubr.f32.mxu0 0.0
    %418 = vmatmul.mubr.f32.gmra.mrb[0].mxu0 %v315
    %v419 = vpop.f32.mrb[0].mxu0
    %v420 = vadd.f32 0.0, %v419
    %v421 = vpop.f32.mrb[0].mxu0
    %422 = vmatprep.mubr.f32.mxu0 0.0
    %423 = vmatmul.mubr.f32.gmra.mrb[0].mxu0 %v318
    %v424 = vpop.f32.mrb[0].mxu0
    %v425 = vadd.f32 0.0, %v424
    %v426 = vpop.f32.mrb[0].mxu0
    %427 = vmatprep.mubr.f32.mxu0 0.0
    %428 = vmatmul.mubr.f32.gmra.mrb[0].mxu0 %v321
    %v429 = vpop.f32.mrb[0].mxu0
    %v430 = vadd.f32 0.0, %v429
    %v431 = vpop.f32.mrb[0].mxu0
    %432 = vdwg.mxu0
    %v433 = vmax.f32 %v390, %v395
    %v434 = vmax.f32 %v433, %v400
    %v435 = vsub.f32 %v390, %v434
    %v436 = vmul.f32 %v435, 1.442695
    %v437 = vpow.pop %v436
    %v438 = vsub.f32 %v395, %v434
    %v439 = vmul.f32 %v438, 1.442695
    %v440 = vpow.pop %v439
    %v441 = vsub.f32 %v400, %v434
    %v442 = vmul.f32 %v441, 1.442695
    %v443 = vpow.pop %v442
    %v444 = vadd.f32 %v437, %v440
    %v445 = vadd.f32 %v444, %v443
    %v446 = vrcp.pop %v445
    %v447 = vmul.f32 %v437, %v446
    %448 = vrot.lane.b32.xlu0 %v258, 64
    %v449 = vpop.permute.xlu0 %448
    %v451 = vmul.f32 %v447, %v449
    %v452 = vmul.f32 %v440, %v446
    %453 = vrot.lane.b32.xlu0 %v263, 64
    %v454 = vpop.permute.xlu0 %453
    %v456 = vmul.f32 %v452, %v454
    %v457 = vadd.f32 %v451, %v456
    %v458 = vmul.f32 %v443, %v446
    %459 = vrot.lane.b32.xlu0 %v268, 64
    %v460 = vpop.permute.xlu0 %459
    %v462 = vmul.f32 %v458, %v460
    %v463 = vadd.f32 %v457, %v462
    %v464 = vmax.f32 %v405, %v410
    %v465 = vmax.f32 %v464, %v415
    %v466 = vsub.f32 %v405, %v465
    %v467 = vmul.f32 %v466, 1.442695
    %v468 = vpow.pop %v467
    %v469 = vsub.f32 %v410, %v465
    %v470 = vmul.f32 %v469, 1.442695
    %v471 = vpow.pop %v470
    %v472 = vsub.f32 %v415, %v465
    %v473 = vmul.f32 %v472, 1.442695
    %v474 = vpow.pop %v473
    %v475 = vadd.f32 %v468, %v471
    %v476 = vadd.f32 %v475, %v474
    %v477 = vrcp.pop %v476
    %v478 = vmul.f32 %v468, %v477
    %v479 = vmul.f32 %v478, %v449
    %v480 = vmul.f32 %v471, %v477
    %v481 = vmul.f32 %v480, %v454
    %v482 = vadd.f32 %v479, %v481
    %v483 = vmul.f32 %v474, %v477
    %v484 = vmul.f32 %v483, %v460
    %v485 = vadd.f32 %v482, %v484
    %v486 = vadd.f32 %v463, %v485
    %v487 = vmax.f32 %v420, %v425
    %v488 = vmax.f32 %v487, %v430
    %v489 = vsub.f32 %v420, %v488
    %v490 = vmul.f32 %v489, 1.442695
    %v491 = vpow.pop %v490
    %v492 = vsub.f32 %v425, %v488
    %v493 = vmul.f32 %v492, 1.442695
    %v494 = vpow.pop %v493
    %v495 = vsub.f32 %v430, %v488
    %v496 = vmul.f32 %v495, 1.442695
    %v497 = vpow.pop %v496
    %v498 = vadd.f32 %v491, %v494
    %v499 = vadd.f32 %v498, %v497
    %v500 = vrcp.pop %v499
    %v501 = vmul.f32 %v491, %v500
    %v502 = vmul.f32 %v501, %v449
    %v503 = vmul.f32 %v494, %v500
    %v504 = vmul.f32 %v503, %v454
    %v505 = vadd.f32 %v502, %v504
    %v506 = vmul.f32 %v497, %v500
    %v507 = vmul.f32 %v506, %v460
    %v508 = vadd.f32 %v505, %v507
    %v509 = vadd.f32 %v486, %v508
    %v510 = vld [vmem:[#allocation6] sm:$0xff]
    %v511 = vld [vmem:[#allocation6 + $0x8] sm:$0xff]
    %v512 = vld [vmem:[#allocation6 + $0x10] sm:$0xff]
    %v513 = vld [vmem:[#allocation6 + $0x18] sm:$0xff]
    %v514 = vld [vmem:[%s6] sm:$0x1]
    %v516 = vlaneseq
    %v517 = vshrl.u32 %v516, 7
    %v518 = vsub.s32 0, %v517
    %v519 = vrot.slane %v514, %v518
    %v522 = vsel %vm181, %v509, 0
    %524 = vmatprep.subr.mxu0 0.0
    %525 = vmatpush1.msra.mxu0 %v510
    %526 = vmatprep.subr.mxu0 0.0
    %527 = vmatpush1.msra.mxu0 %v511
    %528 = vmatprep.subr.mxu0 0.0
    %529 = vmatpush1.msra.mxu0 %v512
    %530 = vmatprep.subr.mxu0 0.0
    %531 = vmatpush1.msra.mxu0 %v513
    %532 = vmatprep.subr.mxu0 0.0
    %533 = vmatpush1.msra.mxu0 0.0
    %534 = vmatprep.subr.mxu0 0.0
    %535 = vmatpush1.msra.mxu0 0.0
    %536 = vmatprep.subr.mxu0 0.0
    %537 = vmatpush1.msra.mxu0 0.0
    %538 = vmatprep.subr.mxu0 0.0
    %539 = vmatpush1.msra.mxu0 0.0
    %540 = vmatprep.subr.mxu0 0.0
    %541 = vmatpush1.msra.mxu0 0.0
    %542 = vmatprep.subr.mxu0 0.0
    %543 = vmatpush1.msra.mxu0 0.0
    %544 = vmatprep.subr.mxu0 0.0
    %545 = vmatpush1.msra.mxu0 0.0
    %546 = vmatprep.subr.mxu0 0.0
    %547 = vmatpush1.msra.mxu0 0.0
    %548 = vmatprep.subr.mxu0 0.0
    %549 = vmatpush1.msra.mxu0 0.0
    %550 = vmatprep.subr.mxu0 0.0
    %551 = vmatpush1.msra.mxu0 0.0
    %552 = vmatprep.subr.mxu0 0.0
    %553 = vmatpush1.msra.mxu0 0.0
    %554 = vmatprep.subr.mxu0 0.0
    %555 = vmatpush1.msra.mxu0 0.0
    %556 = vmatprep.subr.mxu0 0.0
    %557 = vmatpush1.msra.mxu0 0.0
    %558 = vmatprep.subr.mxu0 0.0
    %559 = vmatpush1.msra.mxu0 0.0
    %560 = vmatprep.subr.mxu0 0.0
    %561 = vmatpush1.msra.mxu0 0.0
    %562 = vmatprep.subr.mxu0 0.0
    %563 = vmatpush1.msra.mxu0 0.0
    %564 = vmatprep.subr.mxu0 0.0
    %565 = vmatpush1.msra.mxu0 0.0
    %566 = vmatprep.subr.mxu0 0.0
    %567 = vmatpush1.msra.mxu0 0.0
    %568 = vmatprep.subr.mxu0 0.0
    %569 = vmatpush1.msra.mxu0 0.0
    %570 = vmatprep.subr.mxu0 0.0
    %571 = vmatpush1.msra.mxu0 0.0
    %572 = vmatprep.subr.mxu0 0.0
    %573 = vmatpush1.msra.mxu0 0.0
    %574 = vmatprep.subr.mxu0 0.0
    %575 = vmatpush1.msra.mxu0 0.0
    %576 = vmatprep.subr.mxu0 0.0
    %577 = vmatpush1.msra.mxu0 0.0
    %578 = vmatprep.subr.mxu0 0.0
    %579 = vmatpush1.msra.mxu0 0.0
    %580 = vmatprep.subr.mxu0 0.0
    %581 = vmatpush1.msra.mxu0 0.0
    %582 = vmatprep.subr.mxu0 0.0
    %583 = vmatpush1.msra.mxu0 0.0
    %584 = vmatprep.subr.mxu0 0.0
    %585 = vmatpush1.msra.mxu0 0.0
    %586 = vmatprep.subr.mxu0 0.0
    %587 = vmatpush1.msra.mxu0 0.0
    %588 = vmatprep.mubr.f32.mxu0 0.0
    %589 = vmatmul.mubr.f32.gmra.mrb[0].mxu0 %v522
    %v590 = vpop.f32.mrb[0].mxu0
    %v591 = vadd.f32 %v519, %v590
    %v592 = vpop.f32.mrb[0].mxu0
    %593 = vdwg.mxu0
    %v594 = vmax.f32 %v591, 0.0
    %v595 = vld [vmem:[%s7] sm:$0x1]
    %v596 = vld [vmem:[#allocation2] sm:$0x1]
    %598 = vset.pattern.permute.xlu0 0
    %599 = vperm.xlu0 %598, %v596
    %v600 = vpop.permute.xlu0 %599
    %v602 = vlaneseq
    %v603 = vshrl.u32 %v602, 7
    %v604 = vsub.s32 0, %v603
    %v605 = vrot.slane %v600, %v604
    %vm606 = vcmask 523264
    %v608 = vsel %vm606, %v595, 0
    %v611 = vsel %vm606, %v594, 0
    %613 = vmatprep.subr.mxu0 0.0
    %614 = vmatpush1.xpose.msra.mxu0 %v611
    %615 = vmatprep.subr.mxu0 0.0
    %616 = vmatpush1.xpose.msra.mxu0 0.0
    %617 = vmatprep.subr.mxu0 0.0
    %618 = vmatpush1.xpose.msra.mxu0 0.0
    %619 = vmatprep.subr.mxu0 0.0
    %620 = vmatpush1.xpose.msra.mxu0 0.0
    %621 = vmatprep.subr.mxu0 0.0
    %622 = vmatpush1.xpose.msra.mxu0 0.0
    %623 = vmatprep.subr.mxu0 0.0
    %624 = vmatpush1.xpose.msra.mxu0 0.0
    %625 = vmatprep.subr.mxu0 0.0
    %626 = vmatpush1.xpose.msra.mxu0 0.0
    %627 = vmatprep.subr.mxu0 0.0
    %628 = vmatpush1.xpose.msra.mxu0 0.0
    %629 = vmatprep.subr.mxu0 0.0
    %630 = vmatpush1.xpose.msra.mxu0 0.0
    %631 = vmatprep.subr.mxu0 0.0
    %632 = vmatpush1.xpose.msra.mxu0 0.0
    %633 = vmatprep.subr.mxu0 0.0
    %634 = vmatpush1.xpose.msra.mxu0 0.0
    %635 = vmatprep.subr.mxu0 0.0
    %636 = vmatpush1.xpose.msra.mxu0 0.0
    %637 = vmatprep.subr.mxu0 0.0
    %638 = vmatpush1.xpose.msra.mxu0 0.0
    %639 = vmatprep.subr.mxu0 0.0
    %640 = vmatpush1.xpose.msra.mxu0 0.0
    %641 = vmatprep.subr.mxu0 0.0
    %642 = vmatpush1.xpose.msra.mxu0 0.0
    %643 = vmatprep.subr.mxu0 0.0
    %644 = vmatpush1.xpose.msra.mxu0 0.0
    %645 = vmatprep.subr.mxu0 0.0
    %646 = vmatpush1.xpose.msra.mxu0 0.0
    %647 = vmatprep.subr.mxu0 0.0
    %648 = vmatpush1.xpose.msra.mxu0 0.0
    %649 = vmatprep.subr.mxu0 0.0
    %650 = vmatpush1.xpose.msra.mxu0 0.0
    %651 = vmatprep.subr.mxu0 0.0
    %652 = vmatpush1.xpose.msra.mxu0 0.0
    %653 = vmatprep.subr.mxu0 0.0
    %654 = vmatpush1.xpose.msra.mxu0 0.0
    %655 = vmatprep.subr.mxu0 0.0
    %656 = vmatpush1.xpose.msra.mxu0 0.0
    %657 = vmatprep.subr.mxu0 0.0
    %658 = vmatpush1.xpose.msra.mxu0 0.0
    %659 = vmatprep.subr.mxu0 0.0
    %660 = vmatpush1.xpose.msra.mxu0 0.0
    %661 = vmatprep.subr.mxu0 0.0
    %662 = vmatpush1.xpose.msra.mxu0 0.0
    %663 = vmatprep.subr.mxu0 0.0
    %664 = vmatpush1.xpose.msra.mxu0 0.0
    %665 = vmatprep.subr.mxu0 0.0
    %666 = vmatpush1.xpose.msra.mxu0 0.0
    %667 = vmatprep.subr.mxu0 0.0
    %668 = vmatpush1.xpose.msra.mxu0 0.0
    %669 = vmatprep.subr.mxu0 0.0
    %670 = vmatpush1.xpose.msra.mxu0 0.0
    %671 = vmatprep.subr.mxu0 0.0
    %672 = vmatpush1.xpose.msra.mxu0 0.0
    %673 = vmatprep.subr.mxu0 0.0
    %674 = vmatpush1.xpose.msra.mxu0 0.0
    %675 = vmatprep.subr.mxu0 0.0
    %676 = vmatpush1.xpose.msra.mxu0 0.0
    %677 = vmatprep.mubr.f32.mxu0 0.0
    %678 = vmatmul.mubr.f32.gmra.mrb[0].mxu0 %v608
    %v679 = vpop.f32.mrb[0].mxu0
    %v680 = vadd.f32 %v605, %v679
    %v681 = vpop.f32.mrb[0].mxu0
    %682 = vdwg.mxu0
    %vm683 = vcmask 57344
    %684 = vst.msk [vmem:[#allocation8] sm:$0x1] %vm683, %v680
    // Predicated region
    $region46: #{tpu_custom_call.1} parent=1 // pred_check
      _
    $region47: #{tpu_custom_call.1} parent=1 // pred_check_branch
      %686 = sbr.rel (0) target = $region49
    $region48: #{tpu_custom_call.1} parent=1 // pred_region
      %s688 = ssub.s32 16, 16
      %689 = vsyncadd [#allocation5], %s688
      %s691 = sshll.u32 [#allocation8], 4
      %s692 = int_to_ptr.vmem [resolvable:$true] %s691
      %694 = dma.vmem_to_hbm [thread:$0]  %s692, 16, %s9, [#allocation5]
    $region49: #{tpu_custom_call.1} parent=1 // pred_fallthru
      _
    // Predicated region
    $region50: #{tpu_custom_call.1} parent=1 // pred_check
      _
    $region51: #{tpu_custom_call.1} parent=1 // pred_check_branch
      %696 = sbr.rel (0) target = $region53
    $region52: #{tpu_custom_call.1} parent=1 // pred_region
      %697 = dma.done [#allocation5], 16
    $region53: #{tpu_custom_call.1} parent=1 // pred_fallthru
      _
    %698 = vsyncpa [#allocation4], 1
    %699 = vsyncpa [#allocation7], 1
    %700 = vsyncpa [#allocation5], 1

</llo_original>
